<compile_context>
chip_gen: v5e
topology: v5e:2x2
jax: 0.10.0
libtpu: 0.0.40
codegen_flags: <defaults>
</compile_context>

<pallas_src>
import functools

import jax
import jax.numpy as jnp
from jax.experimental import pallas as pl
from jax.experimental.pallas import tpu as pltpu

F32 = jnp.float32
BF16 = jnp.bfloat16
VMEM_LIMIT = 32 * 1024 * 1024  # safe on v5e/v6e/v7x; raises v5e's 16 MiB default


# ------------------------------ tile selection -------------------------------
def _row_tile(m, target=256):
    """Largest multiple-of-8 divisor of m that is <= target."""
    assert m % 8 == 0, f"row count {m} must be a multiple of 8"
    t = min(target, m)
    t -= t % 8
    while m % t:
        t -= 8
    return t


def _col_tile(n, target=1024):
    """Tile the lane (N) dim into <= target chunks when it is a big multiple of 128."""
    if n <= target or n % 128:
        return n
    t = target
    while n % t:
        t -= 128
    return t


# --------------------------- dense: x @ w + b (+act) -------------------------
def _dense_kernel(x_ref, w_ref, b_ref, o_ref, *, activation):
    acc = jnp.dot(x_ref[...], w_ref[...], preferred_element_type=jnp.float32)
    acc = acc + b_ref[...]
    if activation == "gelu":
        acc = jax.nn.gelu(acc)
    elif activation == "sigmoid":
        acc = jax.nn.sigmoid(acc)
    o_ref[...] = acc.astype(o_ref.dtype)


def dense(x, w, b, activation="none"):
    M, K = x.shape
    Kw, N = w.shape
    assert K == Kw
    tm = _row_tile(M)
    tn = _col_tile(N)
    return pl.pallas_call(
        functools.partial(_dense_kernel, activation=activation),
        out_shape=jax.ShapeDtypeStruct((M, N), F32),
        grid=(M // tm, N // tn),
        in_specs=[
            pl.BlockSpec((tm, K), lambda i, j: (i, 0)),
            pl.BlockSpec((K, tn), lambda i, j: (0, j)),
            pl.BlockSpec((1, tn), lambda i, j: (0, j)),
        ],
        out_specs=pl.BlockSpec((tm, tn), lambda i, j: (i, j)),
        compiler_params=pltpu.CompilerParams(
            dimension_semantics=("parallel", "parallel"),
            vmem_limit_bytes=VMEM_LIMIT),
    )(x.astype(BF16), w.astype(BF16), b.reshape(1, N).astype(F32))


# ------------------------ fused FFN: GELU(x@w1+b1)@w2+b2 ----------------------
def _ffn_kernel(x_ref, w1_ref, b1_ref, w2_ref, b2_ref, o_ref):
    h = jnp.dot(x_ref[...], w1_ref[...], preferred_element_type=jnp.float32)
    h = jax.nn.gelu(h + b1_ref[...])                       # stays in VMEM
    acc = jnp.dot(h.astype(w2_ref.dtype), w2_ref[...],
                  preferred_element_type=jnp.float32) + b2_ref[...]
    o_ref[...] = acc.astype(o_ref.dtype)


def ffn(x, w1, b1, w2, b2):
    M, D = x.shape
    Dw, I = w1.shape
    assert D == Dw
    tm = _row_tile(M)
    return pl.pallas_call(
        _ffn_kernel,
        out_shape=jax.ShapeDtypeStruct((M, D), F32),
        grid=(M // tm,),
        in_specs=[
            pl.BlockSpec((tm, D), lambda i: (i, 0)),
            pl.BlockSpec((D, I), lambda i: (0, 0)),
            pl.BlockSpec((1, I), lambda i: (0, 0)),
            pl.BlockSpec((I, D), lambda i: (0, 0)),
            pl.BlockSpec((1, D), lambda i: (0, 0)),
        ],
        out_specs=pl.BlockSpec((tm, D), lambda i: (i, 0)),
        compiler_params=pltpu.CompilerParams(
            dimension_semantics=("parallel",),
            vmem_limit_bytes=VMEM_LIMIT),
    )(x.astype(BF16), w1.astype(BF16), b1.reshape(1, I).astype(F32),
      w2.astype(BF16), b2.reshape(1, D).astype(F32))


# ----------------------- LayerNorm (plain and residual) -----------------------
def _ln_math(x, g, b, eps):
    mu = jnp.mean(x, axis=-1, keepdims=True)
    var = jnp.mean(jnp.square(x - mu), axis=-1, keepdims=True)
    return (x - mu) * jax.lax.rsqrt(var + eps) * g + b


def _ln_kernel(x_ref, g_ref, b_ref, o_ref, *, eps):
    o_ref[...] = _ln_math(x_ref[...], g_ref[...], b_ref[...], eps).astype(o_ref.dtype)


def _res_ln_kernel(x_ref, r_ref, g_ref, b_ref, o_ref, *, eps):
    o_ref[...] = _ln_math(x_ref[...] + r_ref[...], g_ref[...], b_ref[...],
                          eps).astype(o_ref.dtype)


def layer_norm(x, gamma, beta, eps=1e-12):
    M, D = x.shape
    tm = _row_tile(M, target=512)
    return pl.pallas_call(
        functools.partial(_ln_kernel, eps=eps),
        out_shape=jax.ShapeDtypeStruct((M, D), F32),
        grid=(M // tm,),
        in_specs=[
            pl.BlockSpec((tm, D), lambda i: (i, 0)),
            pl.BlockSpec((1, D), lambda i: (0, 0)),
            pl.BlockSpec((1, D), lambda i: (0, 0)),
        ],
        out_specs=pl.BlockSpec((tm, D), lambda i: (i, 0)),
        compiler_params=pltpu.CompilerParams(
            dimension_semantics=("parallel",),
            vmem_limit_bytes=VMEM_LIMIT),
    )(x.astype(F32), gamma.reshape(1, D), beta.reshape(1, D))


def residual_layer_norm(x, r, gamma, beta, eps=1e-12):
    M, D = x.shape
    tm = _row_tile(M, target=512)
    return pl.pallas_call(
        functools.partial(_res_ln_kernel, eps=eps),
        out_shape=jax.ShapeDtypeStruct((M, D), F32),
        grid=(M // tm,),
        in_specs=[
            pl.BlockSpec((tm, D), lambda i: (i, 0)),
            pl.BlockSpec((tm, D), lambda i: (i, 0)),
            pl.BlockSpec((1, D), lambda i: (0, 0)),
            pl.BlockSpec((1, D), lambda i: (0, 0)),
        ],
        out_specs=pl.BlockSpec((tm, D), lambda i: (i, 0)),
        compiler_params=pltpu.CompilerParams(
            dimension_semantics=("parallel",),
            vmem_limit_bytes=VMEM_LIMIT),
    )(x.astype(F32), r.astype(F32), gamma.reshape(1, D), beta.reshape(1, D))


# ------------------ multi-head self-attention (all heads / step) --------------
def _attn_kernel(q_ref, k_ref, v_ref, m_ref, o_ref, *, scale):
    q, k, v = q_ref[0], k_ref[0], v_ref[0]              # (H, S, Dh) bf16
    # Q @ K^T via dot_general — MXU consumes K directly, no XLU transpose.
    s = jax.lax.dot_general(q, k, (((2,), (2,)), ((0,), (0,))),
                            preferred_element_type=jnp.float32) * scale
    s = s + m_ref[0]                                    # (1, S) additive mask
    s = s - jnp.max(s, axis=-1, keepdims=True)
    p = jnp.exp(s)
    p = p * pl.reciprocal(jnp.sum(p, axis=-1, keepdims=True), approx=True)
    ctx = jax.lax.dot_general(p.astype(v.dtype), v, (((2,), (1,)), ((0,), (0,))),
                              preferred_element_type=jnp.float32)
    o_ref[0] = ctx.astype(o_ref.dtype)


def mha_attention(q, k, v, mask3d, scale):
    B, H, S, Dh = q.shape
    return pl.pallas_call(
        functools.partial(_attn_kernel, scale=scale),
        out_shape=jax.ShapeDtypeStruct((B, H, S, Dh), F32),
        grid=(B,),
        in_specs=[
            pl.BlockSpec((1, H, S, Dh), lambda b: (b, 0, 0, 0)),
            pl.BlockSpec((1, H, S, Dh), lambda b: (b, 0, 0, 0)),
            pl.BlockSpec((1, H, S, Dh), lambda b: (b, 0, 0, 0)),
            pl.BlockSpec((1, 1, S), lambda b: (b, 0, 0)),
        ],
        out_specs=pl.BlockSpec((1, H, S, Dh), lambda b: (b, 0, 0, 0)),
        compiler_params=pltpu.CompilerParams(
            dimension_semantics=("parallel",),
            vmem_limit_bytes=VMEM_LIMIT),
    )(q.astype(BF16), k.astype(BF16), v.astype(BF16), mask3d.astype(F32))


# ------------------- fused bidirectional LSTM recurrence ----------------------
def _bilstm_kernel(xgf_ref, xgb_ref, whh_ref, of_ref, ob_ref, h_ref, c_ref,
                   *, hidden, batch):
    t = pl.program_id(0)
    H, B = hidden, batch

    @pl.when(t == 0)
    def _():
        h_ref[...] = jnp.zeros_like(h_ref)
        c_ref[...] = jnp.zeros_like(c_ref)

    # Both directions packed on the batch (sublane) axis: rows [0,B) forward,
    # rows [B,2B) backward.  h_ref keeps the hidden state in a block-diagonal
    # (2B, 2H) layout so a single MXU matmul applies BOTH recurrent weights.
    xg = jnp.concatenate([xgf_ref[0], xgb_ref[0]], axis=0)         # (2B, 4H) f32
    rec = jnp.dot(h_ref[...].astype(whh_ref.dtype), whh_ref[...],
                  preferred_element_type=jnp.float32)              # (2B, 4H)
    gates = xg + rec
    # PyTorch gate order: input, forget, cell, output
    i = jax.nn.sigmoid(gates[:, 0 * H:1 * H])
    f = jax.nn.sigmoid(gates[:, 1 * H:2 * H])
    g = jnp.tanh(gates[:, 2 * H:3 * H])
    o = jax.nn.sigmoid(gates[:, 3 * H:4 * H])
    c = f * c_ref[...] + i * g                                      # (2B, H)
    h = o * jnp.tanh(c)                                             # (2B, H)
    c_ref[...] = c
    # Scatter h back into the block-diagonal (2B, 2H) state layout.
    row = jax.lax.broadcasted_iota(jnp.int32, (2 * B, 2 * H), 0)
    col = jax.lax.broadcasted_iota(jnp.int32, (2 * B, 2 * H), 1)
    keep = (row < B) == (col < H)
    h_ref[...] = jnp.where(keep, jnp.concatenate([h, h], axis=1), 0.0)
    of_ref[0] = h[:B]
    ob_ref[0] = h[B:]


def bilstm(x_btd, p, hidden):
    B, T, D = x_btd.shape
    H = hidden
    # One fused input projection for both directions: x @ [Wih_f^T | Wih_b^T].
    w_ih = jnp.concatenate([p["w_ih_f"].T, p["w_ih_b"].T], axis=1)  # (D, 8H)
    b_ih = jnp.concatenate([p["b_ih_f"] + p["b_hh_f"],
                            p["b_ih_b"] + p["b_hh_b"]])             # (8H,)
    x_tb = jnp.transpose(x_btd, (1, 0, 2)).reshape(T * B, D)
    xg = dense(x_tb, w_ih, b_ih).reshape(T, B, 8 * H)
    # Block-stacked recurrent weight (2H, 4H): rows [0,H) fwd, [H,2H) bwd.
    whh = jnp.concatenate([p["w_hh_f"].T, p["w_hh_b"].T], axis=0).astype(BF16)

    hf, hb = pl.pallas_call(
        functools.partial(_bilstm_kernel, hidden=H, batch=B),
        out_shape=(jax.ShapeDtypeStruct((T, B, H), F32),
                   jax.ShapeDtypeStruct((T, B, H), F32)),
        grid=(T,),
        in_specs=[
            # forward-direction gates at time t  (feature block 0 = [0, 4H))
            pl.BlockSpec((1, B, 4 * H), lambda t: (t, 0, 0)),
            # backward-direction gates at time T-1-t (feature block 1 = [4H, 8H));
            # the time reversal lives in the index_map -> no HBM reverse copies.
            pl.BlockSpec((1, B, 4 * H), lambda t: (T - 1 - t, 0, 1)),
            pl.BlockSpec((2 * H, 4 * H), lambda t: (0, 0)),
        ],
        out_specs=(
            pl.BlockSpec((1, B, H), lambda t: (t, 0, 0)),
            pl.BlockSpec((1, B, H), lambda t: (T - 1 - t, 0, 0)),
        ),
        scratch_shapes=[pltpu.VMEM((2 * B, 2 * H), F32),
                        pltpu.VMEM((2 * B, H), F32)],
        compiler_params=pltpu.CompilerParams(
            dimension_semantics=("arbitrary",),
            vmem_limit_bytes=VMEM_LIMIT),
    )(xg, xg, whh)
    # TODO(synk): on v7x the two TensorCores could each run half the batch via
    # core_map; left as a single-TC sequential recurrence here.

    out = jnp.concatenate([hf, hb], axis=-1)        # (T, B, 2H)
    return jnp.transpose(out, (1, 0, 2))            # (B, T, 2H)


# -------------------------------- BERT encoder --------------------------------
def bert_layer(x2d, mask3d, p, B, S, D, H, Dh, scale):
    qkv = dense(x2d, p["w_qkv"], p["b_qkv"])                  # fused QKV (B*S, 3D)
    qkv = qkv.reshape(B, S, 3, H, Dh)
    q = jnp.transpose(qkv[:, :, 0], (0, 2, 1, 3))             # (B, H, S, Dh)
    k = jnp.transpose(qkv[:, :, 1], (0, 2, 1, 3))
    v = jnp.transpose(qkv[:, :, 2], (0, 2, 1, 3))
    ctx = mha_attention(q, k, v, mask3d, scale)
    ctx = jnp.transpose(ctx, (0, 2, 1, 3)).reshape(B * S, D)
    attn_out = dense(ctx, p["wo"], p["bo"])
    x2d = residual_layer_norm(x2d, attn_out, p["ln1_g"], p["ln1_b"])
    ffn_out = ffn(x2d, p["w1"], p["b1"], p["w2"], p["b2"])
    x2d = residual_layer_norm(x2d, ffn_out, p["ln2_g"], p["ln2_b"])
    return x2d


# ------------------------------ full model forward ----------------------------
def ner_forward(params, input_ids, attention_mask, labels=None):
    cfg = params["cfg"]
    B, S = input_ids.shape
    D, H = cfg["hidden"], cfg["heads"]
    Dh = D // H
    scale = 1.0 / (Dh ** 0.5)

    # embeddings (gather kept in plain JAX glue) + LayerNorm (Pallas)
    emb = (params["word_emb"][input_ids]
           + params["pos_emb"][:S][None, :, :]
           + params["type_emb"][0][None, None, :])
    x2d = layer_norm(emb.reshape(B * S, D).astype(F32),
                     params["emb_ln_g"], params["emb_ln_b"])

    mask3d = ((1.0 - attention_mask.astype(F32)) * -1e9).reshape(B, 1, S)
    for layer_p in params["layers"]:
        x2d = bert_layer(x2d, mask3d, layer_p, B, S, D, H, Dh, scale)
    seq_out = x2d.reshape(B, S, D)                     # BertModel(...)[0]

    # BiLSTM(hidden=256, bidirectional) -> (B, S, 512)
    lstm_out = bilstm(seq_out, params["lstm"], cfg["lstm_hidden"])

    # Dropout(p=0.2): eval-mode semantics -> identity.
    feats = lstm_out.reshape(B * S, 2 * cfg["lstm_hidden"])

    # classifier (512 -> 3) + sigmoid fused in the dense kernel.  This matches
    # the PyTorch module exactly: Sigmoid is applied and those activations are
    # both returned as 'logits' AND fed to CrossEntropyLoss.
    logits_pad = dense(feats, params["cls_w_pad"], params["cls_b_pad"],
                       activation="sigmoid")
    logits = logits_pad[:, :cfg["num_labels"]].reshape(B, S, cfg["num_labels"])

    loss = None
    if labels is not None:
        ignore = -100
        active = attention_mask.reshape(-1) == 1
        lbl = jnp.where(active, labels.reshape(-1), ignore)
        lg = logits.reshape(-1, cfg["num_labels"])
        logp = jax.nn.log_softmax(lg, axis=-1)
        valid = lbl != ignore
        safe = jnp.where(valid, lbl, 0)
        nll = -jnp.take_along_axis(logp, safe[:, None], axis=-1)[:, 0]
        loss = jnp.sum(jnp.where(valid, nll, 0.0)) / jnp.maximum(
            jnp.sum(valid.astype(F32)), 1.0)

    return {"loss": loss, "logits": logits}


# -------------------------------- parameter init ------------------------------
def init_params(key, cfg):
    D, I = cfg["hidden"], cfg["intermediate"]
    LH = cfg["lstm_hidden"]

    def nrm(k, shape, scale=0.02):
        return scale * jax.random.normal(k, shape, dtype=F32)

    keys = iter(jax.random.split(key, 256))
    params = {
        "cfg": cfg,
        "word_emb": nrm(next(keys), (cfg["vocab"], D)),
        "pos_emb": nrm(next(keys), (cfg["max_pos"], D)),
        "type_emb": nrm(next(keys), (2, D)),
        "emb_ln_g": jnp.ones((D,), F32),
        "emb_ln_b": jnp.zeros((D,), F32),
        "layers": [],
    }
    for _ in range(cfg["layers"]):
        params["layers"].append({
            "w_qkv": nrm(next(keys), (D, 3 * D)),   # fused [Wq | Wk | Wv]
            "b_qkv": jnp.zeros((3 * D,), F32),
            "wo": nrm(next(keys), (D, D)), "bo": jnp.zeros((D,), F32),
            "ln1_g": jnp.ones((D,), F32), "ln1_b": jnp.zeros((D,), F32),
            "w1": nrm(next(keys), (D, I)), "b1": jnp.zeros((I,), F32),
            "w2": nrm(next(keys), (I, D)), "b2": jnp.zeros((D,), F32),
            "ln2_g": jnp.ones((D,), F32), "ln2_b": jnp.zeros((D,), F32),
        })
    params["lstm"] = {
        "w_ih_f": nrm(next(keys), (4 * LH, D)),
        "w_hh_f": nrm(next(keys), (4 * LH, LH)),
        "b_ih_f": jnp.zeros((4 * LH,), F32),
        "b_hh_f": jnp.zeros((4 * LH,), F32),
        "w_ih_b": nrm(next(keys), (4 * LH, D)),
        "w_hh_b": nrm(next(keys), (4 * LH, LH)),
        "b_ih_b": jnp.zeros((4 * LH,), F32),
        "b_hh_b": jnp.zeros((4 * LH,), F32),
    }
    cls_w = nrm(next(keys), (2 * LH, cfg["num_labels"]))
    cls_b = jnp.zeros((cfg["num_labels"],), F32)
    pad_n = 128 - cfg["num_labels"]                  # lane-dense classifier output
    params["cls_w_pad"] = jnp.pad(cls_w, ((0, 0), (0, pad_n)))
    params["cls_b_pad"] = jnp.pad(cls_b, (0, pad_n))
    return params


# -------------------------------------- main ----------------------------------
if __name__ == "__main__":
    cfg = dict(vocab=100, max_pos=32, hidden=128, heads=2, layers=2,
               intermediate=256, lstm_hidden=256, num_labels=3)
    # Small synthetic "bert-base-chinese"-shaped model (hidden scaled down).
    key = jax.random.PRNGKey(0)
    kp, kid, klab = jax.random.split(key, 3)
    params = init_params(kp, cfg)

    B, S = 2, 8
    input_ids = jax.random.randint(kid, (B, S), 0, cfg["vocab"], dtype=jnp.int32)
    attention_mask = jnp.ones((B, S), jnp.int32).at[1, 6:].set(0)
    labels = jax.random.randint(klab, (B, S), 0, cfg["num_labels"],
                                dtype=jnp.int32)

    out = ner_forward(params, input_ids, attention_mask, labels)
    jax.block_until_ready(out["logits"])
    jax.block_until_ready(out["loss"])
    assert out["logits"].shape == (B, S, cfg["num_labels"])
    print("KERNEL_OK")
</pallas_src>

<mosaic_0001>
module attributes {stable_mosaic.version = 11 : i64} {
  func.func @_ln_kernel(%arg0: i32, %arg1: memref<16x128xf32, #tpu.memory_space<vmem>>, %arg2: memref<1x128xf32, #tpu.memory_space<vmem>>, %arg3: memref<1x128xf32, #tpu.memory_space<vmem>>, %arg4: memref<16x128xf32, #tpu.memory_space<vmem>>) attributes {dimension_semantics = [#tpu.dimension_semantics<parallel>], iteration_bounds = array<i64: 1>, scalar_prefetch = 0 : i64, scratch_operands = 0 : i64, tpu.core_type = #tpu.core_type<tc>, window_params = [{transform_indices = @transform_0, window_bounds = array<i64: 16, 128>}, {pipeline_mode = #tpu.pipeline_mode<synchronous>, transform_indices = @transform_1, window_bounds = array<i64: 1, 128>}, {pipeline_mode = #tpu.pipeline_mode<synchronous>, transform_indices = @transform_2, window_bounds = array<i64: 1, 128>}, {transform_indices = @transform_3, window_bounds = array<i64: 16, 128>}]} {
    %c0 = arith.constant 0 : index
    %c0_0 = arith.constant 0 : index
    %0 = vector.load %arg1[%c0, %c0_0] : memref<16x128xf32, #tpu.memory_space<vmem>>, vector<16x128xf32>
    %c0_1 = arith.constant 0 : index
    %c0_2 = arith.constant 0 : index
    %1 = vector.load %arg2[%c0_1, %c0_2] : memref<1x128xf32, #tpu.memory_space<vmem>>, vector<1x128xf32>
    %c0_3 = arith.constant 0 : index
    %c0_4 = arith.constant 0 : index
    %2 = vector.load %arg3[%c0_3, %c0_4] : memref<1x128xf32, #tpu.memory_space<vmem>>, vector<1x128xf32>
    %cst = arith.constant dense<0.000000e+00> : vector<16xf32>
    %3 = vector.multi_reduction <add>, %0, %cst [1] : vector<16x128xf32> to vector<16xf32>
    %4 = vector.shape_cast %3 : vector<16xf32> to vector<16x1xf32>
    %cst_5 = arith.constant 1.280000e+02 : f32
    %5 = vector.broadcast %cst_5 : f32 to vector<16x1xf32>
    %6 = arith.divf %4, %5 : vector<16x1xf32>
    %7 = vector.broadcast %6 : vector<16x1xf32> to vector<16x128xf32>
    %8 = arith.subf %0, %7 : vector<16x128xf32>
    %9 = arith.mulf %8, %8 : vector<16x128xf32>
    %cst_6 = arith.constant dense<0.000000e+00> : vector<16xf32>
    %10 = vector.multi_reduction <add>, %9, %cst_6 [1] : vector<16x128xf32> to vector<16xf32>
    %11 = vector.shape_cast %10 : vector<16xf32> to vector<16x1xf32>
    %cst_7 = arith.constant 1.280000e+02 : f32
    %12 = vector.broadcast %cst_7 : f32 to vector<16x1xf32>
    %13 = arith.divf %11, %12 : vector<16x1xf32>
    %14 = vector.broadcast %6 : vector<16x1xf32> to vector<16x128xf32>
    %15 = arith.subf %0, %14 : vector<16x128xf32>
    %cst_8 = arith.constant 9.99999996E-13 : f32
    %16 = vector.broadcast %cst_8 : f32 to vector<16x1xf32>
    %17 = arith.addf %13, %16 : vector<16x1xf32>
    %18 = math.rsqrt %17 : vector<16x1xf32>
    %19 = vector.broadcast %18 : vector<16x1xf32> to vector<16x128xf32>
    %20 = arith.mulf %15, %19 : vector<16x128xf32>
    %21 = vector.broadcast %1 : vector<1x128xf32> to vector<16x128xf32>
    %22 = arith.mulf %20, %21 : vector<16x128xf32>
    %23 = vector.broadcast %2 : vector<1x128xf32> to vector<16x128xf32>
    %24 = arith.addf %22, %23 : vector<16x128xf32>
    %c0_9 = arith.constant 0 : index
    %c0_10 = arith.constant 0 : index
    %25 = vector.load %arg4[%c0_9, %c0_10] : memref<16x128xf32, #tpu.memory_space<vmem>>, vector<16x128xf32>
    tpu.vector_store %arg4[%c0_9, %c0_10], %24 {strides = array<i32>} : memref<16x128xf32, #tpu.memory_space<vmem>>, vector<16x128xf32>,
    return
  }
  func.func @transform_0(%arg0: i32) -> (i32, i32) {
    %c0_i32 = arith.constant 0 : i32
    %c0_i32_0 = arith.constant 0 : i32
    return %arg0, %c0_i32 : i32, i32
  }
  func.func @transform_1(%arg0: i32) -> (i32, i32) {
    %c0_i32 = arith.constant 0 : i32
    %c0_i32_0 = arith.constant 0 : i32
    %c0_i32_1 = arith.constant 0 : i32
    return %c0_i32, %c0_i32_0 : i32, i32
  }
  func.func @transform_2(%arg0: i32) -> (i32, i32) {
    %c0_i32 = arith.constant 0 : i32
    %c0_i32_0 = arith.constant 0 : i32
    %c0_i32_1 = arith.constant 0 : i32
    return %c0_i32, %c0_i32_0 : i32, i32
  }
  func.func @transform_3(%arg0: i32) -> (i32, i32) {
    %c0_i32 = arith.constant 0 : i32
    %c0_i32_0 = arith.constant 0 : i32
    return %arg0, %c0_i32 : i32, i32
  }
}

</mosaic_0001>

<llo_original>
// kernel: tpu_custom_call.1
$region0: #{tpu_custom_call.1}
  #allocation0 [shape = 'u32[]', space=smem, size = 0x4, offset = 0x4, fixed_abs, tag = 'smem constant byte address 0x4 - core index']
  #allocation1 [shape = 'u32[72,128]{1,0:T(1,128)}', space=vmem, size = 0x9000, scoped, tag = 'internal scratch']
  %s0 = inlined_call_operand.hbm [shape: f32[16,128], index: 0, kind: input, shape index: {}]
  %s1 = inlined_call_operand.hbm [shape: f32[1,128], index: 1, kind: input, shape index: {}]
  %s2 = inlined_call_operand.vmem [shape: f32[1,128], index: 2, kind: input, shape index: {}]
  %s3 = inlined_call_operand.hbm [shape: f32[16,128], index: 3, kind: output, shape index: {}]
  %s4 = sld [smem:[#allocation0]]
  $region30: #{tpu_custom_call.1} parent=0
    _
  %s6 = ssub.s32 1, %s4
  %s7 = scalar_select 0, %s6, %s4
  $region1: #{tpu_custom_call.1} parent=0
    #allocation2 [shape = 'u8[8192]{0}', space=vmem, size = 0x2000, scoped, tag = 'input window, operand 0, single buffered']
    #allocation3 [shape = 's32[1]{0}', space=sflag, size = 0x4, scoped, tag = 'scoped memory for tpu_custom_call.1']
    #allocation4 [shape = 's32[1]{0}', space=sflag, size = 0x4, scoped, tag = 'scoped memory for tpu_custom_call.1']
    #allocation5 [shape = 'u8[512]{0}', space=vmem, size = 0x400, scoped, tag = 'input window, operand 1, single buffered']
    #allocation6 [shape = 's32[1]{0}', space=sflag, size = 0x4, scoped, tag = 'scoped memory for tpu_custom_call.1']
    #allocation7 [shape = 'u8[8192]{0}', space=vmem, size = 0x2000, scoped, tag = 'output window, operand 0, single buffered']
    %8 = vsyncpa [#allocation3], 0
    %9 = vsyncpa [#allocation6], 0
    %10 = vsyncpa [#allocation4], 0
    // Predicated region
    $region2: #{tpu_custom_call.1} parent=1 // pred_check
      _
    $region3: #{tpu_custom_call.1} parent=1 // pred_check_branch
      %12 = sbr.rel (0) target = $region5
    $region4: #{tpu_custom_call.1} parent=1 // pred_region
      %14 = vsyncadd [#allocation3], 0
      %s15 = sshll.u32 %s0, 4
      %s16 = int_to_ptr.hbm [resolvable:$true] %s15
      %s17 = sshll.u32 [#allocation2], 4
      %s18 = int_to_ptr.vmem [resolvable:$true] %s17
      %23 = dma.hbm_to_vmem [thread:$0]  %s16, 256, %s18, [#allocation3], 128, 128, 8
    $region5: #{tpu_custom_call.1} parent=1 // pred_fallthru
      _
    // Predicated region
    $region6: #{tpu_custom_call.1} parent=1 // pred_check
      _
    $region7: #{tpu_custom_call.1} parent=1 // pred_check_branch
      %25 = sbr.rel (0) target = $region9
    $region8: #{tpu_custom_call.1} parent=1 // pred_region
      %27 = vsyncadd [#allocation6], 0
      %s29 = sshll.u32 %s1, 4
      %s30 = int_to_ptr.hbm [resolvable:$true] %s29
      %s31 = sshll.u32 [#allocation5], 4
      %s32 = int_to_ptr.vmem [resolvable:$true] %s31
      %34 = dma.hbm_to_vmem [thread:$0]  %s30, 16, %s32, [#allocation6]
    $region9: #{tpu_custom_call.1} parent=1 // pred_fallthru
      _
    // Predicated region
    $region10: #{tpu_custom_call.1} parent=1 // pred_check
      _
    $region11: #{tpu_custom_call.1} parent=1 // pred_check_branch
      %36 = sbr.rel (0) target = $region13
    $region12: #{tpu_custom_call.1} parent=1 // pred_region
      _
    $region13: #{tpu_custom_call.1} parent=1 // pred_fallthru
      _
    // Predicated region
    $region14: #{tpu_custom_call.1} parent=1 // pred_check
      _
    $region15: #{tpu_custom_call.1} parent=1 // pred_check_branch
      %38 = sbr.rel (0) target = $region17
    $region16: #{tpu_custom_call.1} parent=1 // pred_region
      %40 = dma.done [#allocation3], 256
    $region17: #{tpu_custom_call.1} parent=1 // pred_fallthru
      _
    // Predicated region
    $region18: #{tpu_custom_call.1} parent=1 // pred_check
      _
    $region19: #{tpu_custom_call.1} parent=1 // pred_check_branch
      %42 = sbr.rel (0) target = $region21
    $region20: #{tpu_custom_call.1} parent=1 // pred_region
      %44 = dma.done [#allocation6], 16
    $region21: #{tpu_custom_call.1} parent=1 // pred_fallthru
      _
    %v45 = vld [vmem:[#allocation2] sm:$0xff]
    %v46 = vld [vmem:[#allocation2 + $0x8] sm:$0xff]
    %v47 = vld [vmem:[#allocation5] sm:$0x1]
    %v48 = vld [vmem:[%s2] sm:$0x1]
    %49 = vadd.xlane.f32.xlu0 %v45
    %v50 = vpop.xlane.xlu0 %49
    %51 = vadd.xlane.f32.xlu0 %v46
    %v52 = vpop.xlane.xlu0 %51
    %v53 = vrcp.pop 128.0
    %v54 = vmul.f32 128.0, %v53
    %v55 = vsub.f32 1.0, %v54
    %v56 = vmul.f32 %v53, %v55
    %v57 = vadd.f32 %v53, %v56
    %vm58 = vweird.f32 %v53
    %v59 = vsel %vm58, %v53, %v57
    %v60 = vmul.f32 %v50, %v59
    %v61 = vmul.f32 %v52, %v59
    %v62 = vsub.f32 %v45, %v60
    %v63 = vsub.f32 %v46, %v61
    %v64 = vmul.f32 %v62, %v62
    %v65 = vmul.f32 %v63, %v63
    %66 = vadd.xlane.f32.xlu0 %v64
    %v67 = vpop.xlane.xlu0 %66
    %68 = vadd.xlane.f32.xlu0 %v65
    %v69 = vpop.xlane.xlu0 %68
    %v70 = vmul.f32 %v67, %v59
    %v71 = vmul.f32 %v69, %v59
    %v72 = vadd.f32 %v70, 1e-12
    %v73 = vadd.f32 %v71, 1e-12
    %v74 = vrsqrt.pop %v72
    %v75 = vmul.f32 %v74, %v72
    %v76 = vmul.f32 %v75, %v74
    %v77 = vmul.f32 0.5, %v76
    %v78 = vsub.f32 1.5, %v77
    %v79 = vmul.f32 %v74, %v78
    %vm80 = vweird.f32 %v72
    %vm81 = vweird.f32 %v74
    %vm82 = vmor %vm80, %vm81
    %v83 = vsel %vm82, %v74, %v79
    %v84 = vrsqrt.pop %v73
    %v85 = vmul.f32 %v84, %v73
    %v86 = vmul.f32 %v85, %v84
    %v87 = vmul.f32 0.5, %v86
    %v88 = vsub.f32 1.5, %v87
    %v89 = vmul.f32 %v84, %v88
    %vm90 = vweird.f32 %v73
    %vm91 = vweird.f32 %v84
    %vm92 = vmor %vm90, %vm91
    %v93 = vsel %vm92, %v84, %v89
    %v94 = vmul.f32 %v62, %v83
    %v95 = vmul.f32 %v63, %v93
    %v97 = vperm.slane %v47, 0
    %v99 = vmul.f32 %v94, %v97
    %v100 = vmul.f32 %v95, %v97
    %v102 = vperm.slane %v48, 0
    %v104 = vadd.f32 %v99, %v102
    %v105 = vadd.f32 %v100, %v102
    %106 = vst [vmem:[#allocation7] sm:$0xff] %v104
    %107 = vst [vmem:[#allocation7 + $0x8] sm:$0xff] %v105
    // Predicated region
    $region22: #{tpu_custom_call.1} parent=1 // pred_check
      _
    $region23: #{tpu_custom_call.1} parent=1 // pred_check_branch
      %109 = sbr.rel (0) target = $region25
    $region24: #{tpu_custom_call.1} parent=1 // pred_region
      %111 = vsyncadd [#allocation4], 0
      %s112 = sshll.u32 [#allocation7], 4
      %s113 = int_to_ptr.vmem [resolvable:$true] %s112
      %s114 = sshll.u32 %s3, 4
      %s115 = int_to_ptr.hbm [resolvable:$true] %s114
      %120 = dma.vmem_to_hbm [thread:$0]  %s113, 256, %s115, [#allocation4], 128, 128, 8
    $region25: #{tpu_custom_call.1} parent=1 // pred_fallthru
      _
    // Predicated region
    $region26: #{tpu_custom_call.1} parent=1 // pred_check
      _
    $region27: #{tpu_custom_call.1} parent=1 // pred_check_branch
      %122 = sbr.rel (0) target = $region29
    $region28: #{tpu_custom_call.1} parent=1 // pred_region
      %124 = dma.done [#allocation4], 256
    $region29: #{tpu_custom_call.1} parent=1 // pred_fallthru
      _
    %125 = vsyncpa [#allocation3], 1
    %126 = vsyncpa [#allocation6], 1
    %127 = vsyncpa [#allocation4], 1

</llo_original>
